<compile_context>
chip_gen: v6e
topology: v6e:2x2x1
jax: 0.10.0
libtpu: 0.0.40
codegen_flags: <defaults>
</compile_context>

<pallas_src>
import jax
import jax.numpy as jnp
from jax.experimental import pallas as pl
from jax.experimental.pallas import tpu as pltpu

KSIZE = 3  # Conv3d kernel_size=3


def conv3d_gemm_kernel(p_ref, w_ref, b_ref, o_ref):
    # p_ref: (1, K, TDHW)    im2col patches for one batch element / spatial tile
    # w_ref: (Cout, K)       reshaped weights, resident in VMEM
    # b_ref: (Cout, 1)       bias (broadcast along lanes)
    # o_ref: (1, Cout, TDHW) lane-dense output tile
    acc = jnp.dot(w_ref[...], p_ref[0], preferred_element_type=jnp.float32)
    acc = acc + b_ref[...]                       # (Cout, TDHW) + (Cout, 1)
    o_ref[0] = acc.astype(o_ref.dtype)


def _pick_spatial_tile(dhw):
    # Largest lane-friendly tile that evenly divides the flattened spatial dim;
    # falling back to a single full block (block dim == array dim is legal).
    for t in (2048, 1024, 512, 256, 128):
        if dhw % t == 0:
            return t
    return dhw


def conv3d_pallas(x, w, b):
    """x: (N, Cin, D, H, W) float32 (PyTorch NCDHW). Returns (N, Cout, D, H, W)."""
    N, Cin, D, H, W = x.shape
    Cout = w.shape[0]
    K = Cin * KSIZE ** 3
    DHW = D * H * W
    TDHW = _pick_spatial_tile(DHW)

    # --- wrapper-side im2col (single fused XLA pass; ~27*Cin*DHW*4 bytes) ------
    x_pad = jnp.pad(x, ((0, 0), (0, 0), (1, 1), (1, 1), (1, 1)))
    taps = [x_pad[:, :, kd:kd + D, kh:kh + H, kw:kw + W]
            for kd in range(KSIZE) for kh in range(KSIZE) for kw in range(KSIZE)]
    # (N, Cin, 27, D, H, W) -> (N, Cin*27, D*H*W); flatten order matches
    # w.reshape(Cout, Cin*27) (cin major, then kd, kh, kw).
    patches = jnp.stack(taps, axis=2).reshape(N, K, DHW)

    w2 = w.reshape(Cout, K).astype(x.dtype)      # (Cout, 81)
    b2 = b.reshape(Cout, 1).astype(x.dtype)      # (Cout, 1)

    cost = pl.CostEstimate(
        flops=2 * N * Cout * K * DHW + N * Cout * DHW,
        transcendentals=0,
        bytes_accessed=4 * (N * K * DHW + Cout * K + Cout + N * Cout * DHW),
    )

    out = pl.pallas_call(
        conv3d_gemm_kernel,
        out_shape=jax.ShapeDtypeStruct((N, Cout, DHW), x.dtype),
        grid_spec=pltpu.PrefetchScalarGridSpec(
            num_scalar_prefetch=0,
            grid=(N, DHW // TDHW),
            in_specs=[
                pl.BlockSpec((1, K, TDHW), lambda n, j: (n, 0, j)),
                pl.BlockSpec((Cout, K), lambda n, j: (0, 0)),
                pl.BlockSpec((Cout, 1), lambda n, j: (0, 0)),
            ],
            out_specs=pl.BlockSpec((1, Cout, TDHW), lambda n, j: (n, 0, j)),
        ),
        compiler_params=pltpu.CompilerParams(
            dimension_semantics=("parallel", "parallel")),
        cost_estimate=cost,
    )(patches, w2, b2)

    # Output is already channels-first; this reshape is free (no transpose).
    return out.reshape(N, Cout, D, H, W)


if __name__ == "__main__":
    key = jax.random.PRNGKey(0)
    kx, kw, kb = jax.random.split(key, 3)

    # Small shapes consistent with Conv3d(3, 10, k=3, p=1): N=2, Cin=3, D=H=W=8
    N, Cin, Cout, D, H, W = 2, 3, 10, 8, 8, 8
    x = jax.random.normal(kx, (N, Cin, D, H, W), dtype=jnp.float32)

    # Deterministic parameter init (PyTorch-style uniform bound = 1/sqrt(fan_in)).
    fan_in = Cin * KSIZE * KSIZE * KSIZE
    bound = 1.0 / (fan_in ** 0.5)
    w = jax.random.uniform(kw, (Cout, Cin, KSIZE, KSIZE, KSIZE),
                           minval=-bound, maxval=bound, dtype=jnp.float32)
    b = jax.random.uniform(kb, (Cout,), minval=-bound, maxval=bound,
                           dtype=jnp.float32)

    out = jax.block_until_ready(conv3d_pallas(x, w, b))
    assert out.shape == (N, Cout, D, H, W)

    # Cross-check against XLA's conv (plain JAX reference).
    ref = jax.lax.conv_general_dilated(
        x, w, window_strides=(1, 1, 1),
        padding=((1, 1), (1, 1), (1, 1)),
        dimension_numbers=("NCDHW", "OIDHW", "NCDHW"),
    ) + b.reshape(1, Cout, 1, 1, 1)
    assert jnp.allclose(out, ref, atol=1e-4, rtol=1e-4), \
        float(jnp.max(jnp.abs(out - ref)))

    print("KERNEL_OK")
</pallas_src>

<mosaic_0001>
module attributes {stable_mosaic.version = 11 : i64} {
  func.func @conv3d_gemm_kernel(%arg0: i32, %arg1: i32, %arg2: memref<1x81x512xf32, #tpu.memory_space<vmem>>, %arg3: memref<10x81xf32, #tpu.memory_space<vmem>>, %arg4: memref<10x1xf32, #tpu.memory_space<vmem>>, %arg5: memref<1x10x512xf32, #tpu.memory_space<vmem>>) attributes {dimension_semantics = [#tpu.dimension_semantics<parallel>, #tpu.dimension_semantics<parallel>], iteration_bounds = array<i64: 2, 1>, scalar_prefetch = 0 : i64, scratch_operands = 0 : i64, tpu.core_type = #tpu.core_type<tc>, window_params = [{transform_indices = @transform_0, window_bounds = array<i64: 1, 81, 512>}, {pipeline_mode = #tpu.pipeline_mode<synchronous>, transform_indices = @transform_1, window_bounds = array<i64: 10, 81>}, {pipeline_mode = #tpu.pipeline_mode<synchronous>, transform_indices = @transform_2, window_bounds = array<i64: 10, 1>}, {transform_indices = @transform_3, window_bounds = array<i64: 1, 10, 512>}]} {
    %c0 = arith.constant 0 : index
    %c0_0 = arith.constant 0 : index
    %0 = vector.load %arg3[%c0, %c0_0] : memref<10x81xf32, #tpu.memory_space<vmem>>, vector<10x81xf32>
    %c0_1 = arith.constant 0 : index
    %c0_2 = arith.constant 0 : index
    %c0_3 = arith.constant 0 : index
    %1 = vector.load %arg2[%c0_1, %c0_2, %c0_3] : memref<1x81x512xf32, #tpu.memory_space<vmem>>, vector<1x81x512xf32>
    %2 = vector.shape_cast %1 : vector<1x81x512xf32> to vector<81x512xf32>
    %cst = arith.constant dense<0.000000e+00> : vector<10x512xf32>
    %3 = tpu.matmul %0, %2, %cst {dimension_numbers = #tpu.dot_dimension_numbers<[1], [0], [0], [1], [0, 0, 1, 1], [], []>} : vector<10x81xf32>, vector<81x512xf32>, vector<10x512xf32> -> vector<10x512xf32>
    %c0_4 = arith.constant 0 : index
    %c0_5 = arith.constant 0 : index
    %4 = vector.load %arg4[%c0_4, %c0_5] : memref<10x1xf32, #tpu.memory_space<vmem>>, vector<10x1xf32>
    %5 = vector.broadcast %4 : vector<10x1xf32> to vector<10x512xf32>
    %6 = arith.addf %3, %5 : vector<10x512xf32>
    %c0_6 = arith.constant 0 : index
    %c0_7 = arith.constant 0 : index
    %c0_8 = arith.constant 0 : index
    %7 = vector.load %arg5[%c0_6, %c0_7, %c0_8] : memref<1x10x512xf32, #tpu.memory_space<vmem>>, vector<1x10x512xf32>
    %8 = vector.shape_cast %7 : vector<1x10x512xf32> to vector<10x512xf32>
    %9 = vector.shape_cast %6 : vector<10x512xf32> to vector<1x10x512xf32>
    tpu.vector_store %arg5[%c0_6, %c0_7, %c0_8], %9 {strides = array<i32>} : memref<1x10x512xf32, #tpu.memory_space<vmem>>, vector<1x10x512xf32>,
    return
  }
  func.func @transform_0(%arg0: i32, %arg1: i32) -> (i32, i32, i32) {
    %c0_i32 = arith.constant 0 : i32
    %c0_i32_0 = arith.constant 0 : i32
    return %arg0, %c0_i32, %arg1 : i32, i32, i32
  }
  func.func @transform_1(%arg0: i32, %arg1: i32) -> (i32, i32) {
    %c0_i32 = arith.constant 0 : i32
    %c0_i32_0 = arith.constant 0 : i32
    %c0_i32_1 = arith.constant 0 : i32
    return %c0_i32, %c0_i32_0 : i32, i32
  }
  func.func @transform_2(%arg0: i32, %arg1: i32) -> (i32, i32) {
    %c0_i32 = arith.constant 0 : i32
    %c0_i32_0 = arith.constant 0 : i32
    %c0_i32_1 = arith.constant 0 : i32
    return %c0_i32, %c0_i32_0 : i32, i32
  }
  func.func @transform_3(%arg0: i32, %arg1: i32) -> (i32, i32, i32) {
    %c0_i32 = arith.constant 0 : i32
    %c0_i32_0 = arith.constant 0 : i32
    return %arg0, %c0_i32, %arg1 : i32, i32, i32
  }
}

</mosaic_0001>

<llo_original>
// kernel: tpu_custom_call.1
$region0: #{tpu_custom_call.1}
  #allocation0 [shape = 'u32[]', space=smem, size = 0x4, offset = 0x4, fixed_abs, tag = 'smem constant byte address 0x4 - core index']
  #allocation1 [shape = 'u32[144,128]{1,0:T(1,128)}', space=vmem, size = 0x12000, scoped, tag = 'internal scratch']
  %s0 = inlined_call_operand.vmem [shape: f32[2,81,512], index: 0, kind: input, shape index: {}]
  %s1 = inlined_call_operand.vmem [shape: f32[10,81], index: 1, kind: input, shape index: {}]
  %s2 = inlined_call_operand.vmem [shape: f32[10,1], index: 2, kind: input, shape index: {}]
  %s3 = inlined_call_operand.vmem [shape: f32[2,10,512], index: 3, kind: output, shape index: {}]
  %s4 = sld [smem:[#allocation0]]
  $region45: #{tpu_custom_call.1} parent=0
    _
  %s6 = ssub.s32 1, %s4
  %s7 = scalar_select 0, %s6, %s4
  loop: start=0, step=1, limit=4
  $region2: #{tpu_custom_call.1} parent=0 // loop_pre_header
    _
  $region3: #{tpu_custom_call.1} parent=0 // loop_header
    %s9 = sphi 0, %s13
    %p10 = scmp.ge.s32.totalorder %s9, 4
    %s16 = sphi 0, %s28
    %s17 = sphi 0, %s24
    %s18 = sphi 0, %s16
    %s19 = sphi 0, %s17
    %s20 = sphi 0, %s18
    %s21 = sphi 0, %s19
    %s33 = sphi 0, %s35
    %s36 = sphi 0, %s33
    %s37 = sphi 0, %s36
    %s53 = sphi 0, %s37
    %s57 = sphi 0, %s57
    %s59 = sphi 0, %s57
    %s60 = sphi 0, %s59
    %s74 = sphi 0, %s60
    %s78 = sphi 0, %s78
    %s80 = sphi 0, %s78
    %s81 = sphi 0, %s80
    %s95 = sphi 0, %s81
    %s103 = sphi 0, %s105
    %s106 = sphi 0, %s103
    %s107 = sphi 0, %s106
    %s123 = sphi 0, %s107
  $region4: #{tpu_custom_call.1} parent=0 // loop_header_branch
    %12 = sbr.rel (%p10) target = $region8
  $region5: #{tpu_custom_call.1} parent=0 // loop_body
    %s14 = ssub.s32 %s9, 1
    %s15 = ssub.s32 %s9, 2
    %s22 = sadd.s32 1, %s17
    %p23 = scmp.ge.s32.totalorder %s22, 1
    %s24 = scalar_select %p23, 0, %s22
    %s25 = sadd.s32 1, %s16
    %s26 = scalar_select %p23, %s25, %s16
    %p27 = scmp.ge.s32.totalorder %s26, 2
    %s28 = scalar_select %p27, 0, %s26
    %s29 = ssub.s32 %s16, %s28
    %s30 = ssub.s32 %s17, %s24
    %s31 = sor.u32 %s29, %s30
    %p32 = scmp.eq.s32.totalorder %s31, 0
    %s34 = sadd.s32 %s33, 1
    %s35 = scalar_select %p32, %s33, %s34
    %p38 = pneg %p32
    %p39 = scmp.eq.s32.totalorder %s9, 1
    %p40 = por %p38, %p39
    %p41 = scmp.ne.s32.totalorder %s33, %s36
    %p42 = scmp.eq.s32.totalorder %s9, 0
    %p43 = por %p41, %p42
    %p44 = scmp.ne.s32.totalorder %s33, %s36
    %p45 = scmp.eq.s32.totalorder %s14, 1
    %p46 = por %p44, %p45
    %p47 = scmp.ne.s32.totalorder %s36, %s37
    %p48 = scmp.eq.s32.totalorder %s14, 0
    %p49 = por %p47, %p48
    %p50 = scmp.ne.s32.totalorder %s36, %s37
    %p51 = scmp.eq.s32.totalorder %s15, 1
    %p52 = por %p50, %p51
    %p54 = scmp.ne.s32.totalorder %s37, %s53
    %p55 = scmp.eq.s32.totalorder %s15, 0
    %p56 = por %p54, %p55
    %s58 = sadd.s32 %s57, 1
    %p61 = scmp.eq.s32.totalorder %s9, 1
    %p62 = scmp.ne.s32.totalorder %s57, %s59
    %p63 = scmp.eq.s32.totalorder %s9, 0
    %p64 = por %p62, %p63
    %p65 = scmp.ne.s32.totalorder %s57, %s59
    %p66 = scmp.eq.s32.totalorder %s14, 1
    %p67 = por %p65, %p66
    %p68 = scmp.ne.s32.totalorder %s59, %s60
    %p69 = scmp.eq.s32.totalorder %s14, 0
    %p70 = por %p68, %p69
    %p71 = scmp.ne.s32.totalorder %s59, %s60
    %p72 = scmp.eq.s32.totalorder %s15, 1
    %p73 = por %p71, %p72
    %p75 = scmp.ne.s32.totalorder %s60, %s74
    %p76 = scmp.eq.s32.totalorder %s15, 0
    %p77 = por %p75, %p76
    %s79 = sadd.s32 %s78, 1
    %p82 = scmp.eq.s32.totalorder %s9, 1
    %p83 = scmp.ne.s32.totalorder %s78, %s80
    %p84 = scmp.eq.s32.totalorder %s9, 0
    %p85 = por %p83, %p84
    %p86 = scmp.ne.s32.totalorder %s78, %s80
    %p87 = scmp.eq.s32.totalorder %s14, 1
    %p88 = por %p86, %p87
    %p89 = scmp.ne.s32.totalorder %s80, %s81
    %p90 = scmp.eq.s32.totalorder %s14, 0
    %p91 = por %p89, %p90
    %p92 = scmp.ne.s32.totalorder %s80, %s81
    %p93 = scmp.eq.s32.totalorder %s15, 1
    %p94 = por %p92, %p93
    %p96 = scmp.ne.s32.totalorder %s81, %s95
    %p97 = scmp.eq.s32.totalorder %s15, 0
    %p98 = por %p96, %p97
    %s99 = ssub.s32 %s16, %s28
    %s100 = ssub.s32 %s17, %s24
    %s101 = sor.u32 %s99, %s100
    %p102 = scmp.eq.s32.totalorder %s101, 0
    %s104 = sadd.s32 %s103, 1
    %s105 = scalar_select %p102, %s103, %s104
    %p108 = pneg %p102
    %p109 = scmp.eq.s32.totalorder %s9, 1
    %p110 = por %p108, %p109
    %p111 = scmp.ne.s32.totalorder %s103, %s106
    %p112 = scmp.eq.s32.totalorder %s9, 0
    %p113 = por %p111, %p112
    %p114 = scmp.ne.s32.totalorder %s103, %s106
    %p115 = scmp.eq.s32.totalorder %s14, 1
    %p116 = por %p114, %p115
    %p117 = scmp.ne.s32.totalorder %s106, %s107
    %p118 = scmp.eq.s32.totalorder %s14, 0
    %p119 = por %p117, %p118
    %p120 = scmp.ne.s32.totalorder %s106, %s107
    %p121 = scmp.eq.s32.totalorder %s15, 1
    %p122 = por %p120, %p121
    %p124 = scmp.ne.s32.totalorder %s107, %s123
    %p125 = scmp.eq.s32.totalorder %s15, 0
    %p126 = por %p124, %p125
    %p127 = scmp.le.s32.totalorder 1, %s9
    %p128 = scmp.lt.s32.totalorder %s9, 3
    %p129 = pnand %p127, %p128
    %p130 = pneg %p129
    // Predicated region
    $region9: #{tpu_custom_call.1} parent=5 // pred_check
      _
    $region10: #{tpu_custom_call.1} parent=5 // pred_check_branch
      %132 = sbr.rel (%p129) target = $region12
    $region11: #{tpu_custom_call.1} parent=5 // pred_region
      %s133 = ssub.s32 %s9, 1
      // Predicated region
      $region13: #{tpu_custom_call.1} parent=11 // pred_check
        %p134 = pneg %p70
      $region14: #{tpu_custom_call.1} parent=11 // pred_check_branch
        %136 = sbr.rel (%p134) target = $region16
      $region15: #{tpu_custom_call.1} parent=11 // pred_region
        _
      $region16: #{tpu_custom_call.1} parent=11 // pred_fallthru
        _
      // Predicated region
      $region17: #{tpu_custom_call.1} parent=11 // pred_check
        %p137 = pneg %p91
      $region18: #{tpu_custom_call.1} parent=11 // pred_check_branch
        %139 = sbr.rel (%p137) target = $region20
      $region19: #{tpu_custom_call.1} parent=11 // pred_region
        _
      $region20: #{tpu_custom_call.1} parent=11 // pred_fallthru
        _
    $region12: #{tpu_custom_call.1} parent=5 // pred_fallthru
      _
    %p140 = scmp.lt.s32.totalorder %s9, 2
    // Predicated region
    $region21: #{tpu_custom_call.1} parent=5 // pred_check
      %p141 = pneg %p140
    $region22: #{tpu_custom_call.1} parent=5 // pred_check_branch
      %143 = sbr.rel (%p141) target = $region24
    $region23: #{tpu_custom_call.1} parent=5 // pred_region
      // Predicated region
      $region25: #{tpu_custom_call.1} parent=23 // pred_check
        %p144 = pneg %p43
      $region26: #{tpu_custom_call.1} parent=23 // pred_check_branch
        %146 = sbr.rel (%p144) target = $region28
      $region27: #{tpu_custom_call.1} parent=23 // pred_region
        %s147 = smul.u32 4, %s17
        %p148 = scmp.lt.s32.totalorder %s16, 1
        %s149 = scalar_select %p148, %s16, 1
        %p150 = scmp.lt.s32.totalorder %s147, 3
        %s151 = scalar_select %p150, %s147, 3
        %s152 = smul.addr %s149, 44
        %s153 = sadd.s32 %s151, %s152
        %s154 = smul.addr %s153, 8
        %s155 = scalar_lea.vmem %s0, %s154
        %s156 = smul.u32 4, %s17
      $region28: #{tpu_custom_call.1} parent=23 // pred_fallthru
        _
    $region24: #{tpu_custom_call.1} parent=5 // pred_fallthru
      _
    %p157 = scmp.le.s32.totalorder 1, %s9
    %p158 = scmp.lt.s32.totalorder %s9, 3
    %p159 = pnand %p157, %p158
    %p160 = pneg %p159
    // Predicated region
    $region29: #{tpu_custom_call.1} parent=5 // pred_check
      _
    $region30: #{tpu_custom_call.1} parent=5 // pred_check_branch
      %162 = sbr.rel (%p159) target = $region32
    $region31: #{tpu_custom_call.1} parent=5 // pred_region
      %s163 = ssub.s32 %s9, 1
      %s164 = smul.u32 4, %s19
      %p165 = scmp.lt.s32.totalorder %s18, 1
      %s166 = scalar_select %p165, %s18, 1
      %p167 = scmp.lt.s32.totalorder %s164, 3
      %s168 = scalar_select %p167, %s164, 3
      %s169 = smul.addr %s166, 44
      %s170 = sadd.s32 %s168, %s169
      %s171 = smul.addr %s170, 8
      %s172 = scalar_lea.vmem %s0, %s171
      %p173 = pneg %p49
      %p174 = pneg %p46
      %p175 = pneg %p70
      %p176 = pneg %p67
      %p177 = pneg %p91
      %p178 = pneg %p88
      %p179 = pneg %p119
      %p180 = pneg %p116
      %s181 = smul.u32 4, %s19
      %p182 = scmp.lt.s32.totalorder %s18, 1
      %s183 = scalar_select %p182, %s18, 1
      %p184 = scmp.lt.s32.totalorder %s181, 3
      %s185 = scalar_select %p184, %s181, 3
      %s186 = smul.addr %s183, 8
      %s187 = sadd.s32 %s185, %s186
      %s188 = smul.addr %s187, 8
      %s189 = scalar_lea.vmem %s3, %s188
      %s190 = smul.u32 4, %s19
      %p191 = scmp.lt.s32.totalorder %s18, 1
      %s192 = scalar_select %p191, %s18, 1
      %p193 = scmp.lt.s32.totalorder %s190, 3
      %s194 = scalar_select %p193, %s190, 3
      %s195 = smul.addr %s192, 44
      %s196 = sadd.s32 %s194, %s195
      %s197 = smul.addr %s196, 8
      %s198 = scalar_lea.vmem %s0, %s197
      %s199 = smul.u32 4, %s19
      %s200 = smul.u32 4, %s19
      %p201 = scmp.lt.s32.totalorder %s18, 1
      %s202 = scalar_select %p201, %s18, 1
      %p203 = scmp.lt.s32.totalorder %s200, 3
      %s204 = scalar_select %p203, %s200, 3
      %s205 = smul.addr %s202, 8
      %s206 = sadd.s32 %s204, %s205
      %s207 = smul.addr %s206, 8
      %s208 = scalar_lea.vmem %s3, %s207
      %s209 = smul.u32 4, %s19
      %v210 = vld [vmem:[%s1] sm:$0xff]
      %v211 = vld [vmem:[%s1 + $0x8] sm:$0x3]
      %v212 = vld [vmem:[%s198] sm:$0xff]
      %v213 = vld [vmem:[%s198 + $0x8] sm:$0xff]
      %v214 = vld [vmem:[%s198 + $0x10] sm:$0xff]
      %v215 = vld [vmem:[%s198 + $0x18] sm:$0xff]
      %v216 = vld [vmem:[%s198 + $0x20] sm:$0xff]
      %v217 = vld [vmem:[%s198 + $0x28] sm:$0xff]
      %v218 = vld [vmem:[%s198 + $0x30] sm:$0xff]
      %v219 = vld [vmem:[%s198 + $0x38] sm:$0xff]
      %v220 = vld [vmem:[%s198 + $0x40] sm:$0xff]
      %v221 = vld [vmem:[%s198 + $0x48] sm:$0xff]
      %v222 = vld [vmem:[%s198 + $0x50] sm:$0xff]
      %v223 = vld [vmem:[%s198 + $0x58] sm:$0xff]
      %v224 = vld [vmem:[%s198 + $0x60] sm:$0xff]
      %v225 = vld [vmem:[%s198 + $0x68] sm:$0xff]
      %v226 = vld [vmem:[%s198 + $0x70] sm:$0xff]
      %v227 = vld [vmem:[%s198 + $0x78] sm:$0xff]
      %v228 = vld [vmem:[%s198 + $0x80] sm:$0xff]
      %v229 = vld [vmem:[%s198 + $0x88] sm:$0xff]
      %v230 = vld [vmem:[%s198 + $0x90] sm:$0xff]
      %v231 = vld [vmem:[%s198 + $0x98] sm:$0xff]
      %v232 = vld [vmem:[%s198 + $0xa0] sm:$0xff]
      %v233 = vld [vmem:[%s198 + $0xa8] sm:$0xff]
      %v234 = vld [vmem:[%s198 + $0xb0] sm:$0xff]
      %v235 = vld [vmem:[%s198 + $0xb8] sm:$0xff]
      %v236 = vld [vmem:[%s198 + $0xc0] sm:$0xff]
      %v237 = vld [vmem:[%s198 + $0xc8] sm:$0xff]
      %v238 = vld [vmem:[%s198 + $0xd0] sm:$0xff]
      %v239 = vld [vmem:[%s198 + $0xd8] sm:$0xff]
      %v240 = vld [vmem:[%s198 + $0xe0] sm:$0xff]
      %v241 = vld [vmem:[%s198 + $0xe8] sm:$0xff]
      %v242 = vld [vmem:[%s198 + $0xf0] sm:$0xff]
      %v243 = vld [vmem:[%s198 + $0xf8] sm:$0xff]
      %v244 = vld [vmem:[%s198 + $0x100] sm:$0xff]
      %v245 = vld [vmem:[%s198 + $0x108] sm:$0xff]
      %v246 = vld [vmem:[%s198 + $0x110] sm:$0xff]
      %v247 = vld [vmem:[%s198 + $0x118] sm:$0xff]
      %v248 = vld [vmem:[%s198 + $0x120] sm:$0xff]
      %v249 = vld [vmem:[%s198 + $0x128] sm:$0xff]
      %v250 = vld [vmem:[%s198 + $0x130] sm:$0xff]
      %v251 = vld [vmem:[%s198 + $0x138] sm:$0xff]
      %v252 = vld [vmem:[%s198 + $0x140] sm:$0x1]
      %v253 = vld [vmem:[%s198 + $0x148] sm:$0x1]
      %v254 = vld [vmem:[%s198 + $0x150] sm:$0x1]
      %v255 = vld [vmem:[%s198 + $0x158] sm:$0x1]
      %v256 = vld [vmem:[%s2] sm:$0xff]
      %v257 = vld [vmem:[%s2 + $0x8] sm:$0x3]
      %259 = vset.pattern.permute.xlu0 0
      %260 = vperm.xlu0 %259, %v256
      %v261 = vpop.permute.xlu0 %260
      %264 = vset.pattern.permute.xlu0 0
      %265 = vperm.xlu0 %264, %v257
      %v266 = vpop.permute.xlu0 %265
      %vm268 = vcmask 662528
      %v270 = vsel %vm268, %v210, 0
      %v273 = vsel %vm268, %v211, 0
      %vm275 = vcmask 1040384
      %v277 = vsel %vm275, %v252, 0
      %v280 = vsel %vm275, %v253, 0
      %v283 = vsel %vm275, %v254, 0
      %v286 = vsel %vm275, %v255, 0
      %288 = vmatprep.subr.mxu0 0.0
      %289 = vmatpush1.msra.mxu0 0.0
      %290 = vmatprep.subr.mxu0 0.0
      %291 = vmatpush1.msra.mxu0 0.0
      %292 = vmatprep.subr.mxu0 0.0
      %293 = vmatpush1.msra.mxu0 0.0
      %294 = vmatprep.subr.mxu0 0.0
      %295 = vmatpush1.msra.mxu0 0.0
      %296 = vmatprep.subr.mxu0 0.0
      %297 = vmatpush1.msra.mxu0 0.0
      %298 = vmatprep.subr.mxu0 %v280
      %299 = vmatpush1.msra.mxu0 %v277
      %300 = vmatprep.subr.mxu0 %v249
      %301 = vmatpush1.msra.mxu0 %v248
      %302 = vmatprep.subr.mxu0 %v245
      %303 = vmatpush1.msra.mxu0 %v244
      %304 = vmatprep.subr.mxu0 %v241
      %305 = vmatpush1.msra.mxu0 %v240
      %306 = vmatprep.subr.mxu0 %v237
      %307 = vmatpush1.msra.mxu0 %v236
      %308 = vmatprep.subr.mxu0 %v233
      %309 = vmatpush1.msra.mxu0 %v232
      %310 = vmatprep.subr.mxu0 %v229
      %311 = vmatpush1.msra.mxu0 %v228
      %312 = vmatprep.subr.mxu0 %v225
      %313 = vmatpush1.msra.mxu0 %v224
      %314 = vmatprep.subr.mxu0 %v221
      %315 = vmatpush1.msra.mxu0 %v220
      %316 = vmatprep.subr.mxu0 %v217
      %317 = vmatpush1.msra.mxu0 %v216
      %318 = vmatprep.subr.mxu0 %v213
      %319 = vmatpush1.msra.mxu0 %v212
      %320 = vmatprep.subr.mxu0 0.0
      %321 = vmatpush2.msra.mxu0 0.0
      %322 = vmatprep.subr.mxu0 0.0
      %323 = vmatpush2.msra.mxu0 0.0
      %324 = vmatprep.subr.mxu0 0.0
      %325 = vmatpush2.msra.mxu0 0.0
      %326 = vmatprep.subr.mxu0 0.0
      %327 = vmatpush2.msra.mxu0 0.0
      %328 = vmatprep.subr.mxu0 0.0
      %329 = vmatpush2.msra.mxu0 0.0
      %330 = vmatprep.subr.mxu0 0.0
      %331 = vmatpush2.msra.mxu0 0.0
      %332 = vmatprep.subr.mxu0 0.0
      %333 = vmatpush2.msra.mxu0 0.0
      %334 = vmatprep.subr.mxu0 0.0
      %335 = vmatpush2.msra.mxu0 0.0
      %336 = vmatprep.subr.mxu0 0.0
      %337 = vmatpush2.msra.mxu0 0.0
      %338 = vmatprep.subr.mxu0 0.0
      %339 = vmatpush2.msra.mxu0 0.0
      %340 = vmatprep.subr.mxu0 0.0
      %341 = vmatpush2.msra.mxu0 0.0
      %342 = vmatprep.subr.mxu0 0.0
      %343 = vmatpush2.msra.mxu0 0.0
      %344 = vmatprep.subr.mxu0 0.0
      %345 = vmatpush2.msra.mxu0 0.0
      %346 = vmatprep.subr.mxu0 0.0
      %347 = vmatpush2.msra.mxu0 0.0
      %348 = vmatprep.subr.mxu0 0.0
      %349 = vmatpush2.msra.mxu0 0.0
      %350 = vmatprep.subr.mxu0 0.0
      %351 = vmatpush2.msra.mxu0 0.0
      %352 = vmatprep.mubr.f32.mxu0 0.0
      %353 = vmatmul.mubr.f32.gmra.mxu0 %v270
      %v354 = vpop.f32.mrf.mxu0
      %v355 = vadd.f32 %v261, %v354
      %v356 = vpop.f32.mrf.mxu0
      %v357 = vadd.f32 %v261, %v356
      %358 = vmatprep.mubr.f32.mxu0 0.0
      %359 = vmatmul.mubr.f32.gmra.mxu0 %v273
      %v360 = vpop.f32.mrf.mxu0
      %v361 = vadd.f32 %v266, %v360
      %v362 = vpop.f32.mrf.mxu0
      %v363 = vadd.f32 %v266, %v362
      %364 = vdwg.mxu0
      %365 = vmatprep.subr.mxu0 0.0
      %366 = vmatpush1.msra.mxu0 0.0
      %367 = vmatprep.subr.mxu0 0.0
      %368 = vmatpush1.msra.mxu0 0.0
      %369 = vmatprep.subr.mxu0 0.0
      %370 = vmatpush1.msra.mxu0 0.0
      %371 = vmatprep.subr.mxu0 0.0
      %372 = vmatpush1.msra.mxu0 0.0
      %373 = vmatprep.subr.mxu0 0.0
      %374 = vmatpush1.msra.mxu0 0.0
      %375 = vmatprep.subr.mxu0 %v286
      %376 = vmatpush1.msra.mxu0 %v283
      %377 = vmatprep.subr.mxu0 %v251
      %378 = vmatpush1.msra.mxu0 %v250
      %379 = vmatprep.subr.mxu0 %v247
      %380 = vmatpush1.msra.mxu0 %v246
      %381 = vmatprep.subr.mxu0 %v243
      %382 = vmatpush1.msra.mxu0 %v242
      %383 = vmatprep.subr.mxu0 %v239
      %384 = vmatpush1.msra.mxu0 %v238
      %385 = vmatprep.subr.mxu0 %v235
      %386 = vmatpush1.msra.mxu0 %v234
      %387 = vmatprep.subr.mxu0 %v231
      %388 = vmatpush1.msra.mxu0 %v230
      %389 = vmatprep.subr.mxu0 %v227
      %390 = vmatpush1.msra.mxu0 %v226
      %391 = vmatprep.subr.mxu0 %v223
      %392 = vmatpush1.msra.mxu0 %v222
      %393 = vmatprep.subr.mxu0 %v219
      %394 = vmatpush1.msra.mxu0 %v218
      %395 = vmatprep.subr.mxu0 %v215
      %396 = vmatpush1.msra.mxu0 %v214
      %397 = vmatprep.subr.mxu0 0.0
      %398 = vmatpush2.msra.mxu0 0.0
      %399 = vmatprep.subr.mxu0 0.0
      %400 = vmatpush2.msra.mxu0 0.0
      %401 = vmatprep.subr.mxu0 0.0
      %402 = vmatpush2.msra.mxu0 0.0
      %403 = vmatprep.subr.mxu0 0.0
      %404 = vmatpush2.msra.mxu0 0.0
      %405 = vmatprep.subr.mxu0 0.0
      %406 = vmatpush2.msra.mxu0 0.0
      %407 = vmatprep.subr.mxu0 0.0
      %408 = vmatpush2.msra.mxu0 0.0
      %409 = vmatprep.subr.mxu0 0.0
      %410 = vmatpush2.msra.mxu0 0.0
      %411 = vmatprep.subr.mxu0 0.0
      %412 = vmatpush2.msra.mxu0 0.0
      %413 = vmatprep.subr.mxu0 0.0
      %414 = vmatpush2.msra.mxu0 0.0
      %415 = vmatprep.subr.mxu0 0.0
      %416 = vmatpush2.msra.mxu0 0.0
      %417 = vmatprep.subr.mxu0 0.0
      %418 = vmatpush2.msra.mxu0 0.0
      %419 = vmatprep.subr.mxu0 0.0
      %420 = vmatpush2.msra.mxu0 0.0
      %421 = vmatprep.subr.mxu0 0.0
      %422 = vmatpush2.msra.mxu0 0.0
      %423 = vmatprep.subr.mxu0 0.0
      %424 = vmatpush2.msra.mxu0 0.0
      %425 = vmatprep.subr.mxu0 0.0
      %426 = vmatpush2.msra.mxu0 0.0
      %427 = vmatprep.subr.mxu0 0.0
      %428 = vmatpush2.msra.mxu0 0.0
      %429 = vmatprep.mubr.f32.mxu0 0.0
      %430 = vmatmul.mubr.f32.gmra.mxu0 %v270
      %v431 = vpop.f32.mrf.mxu0
      %v432 = vadd.f32 %v261, %v431
      %v433 = vpop.f32.mrf.mxu0
      %v434 = vadd.f32 %v261, %v433
      %435 = vmatprep.mubr.f32.mxu0 0.0
      %436 = vmatmul.mubr.f32.gmra.mxu0 %v273
      %v437 = vpop.f32.mrf.mxu0
      %v438 = vadd.f32 %v266, %v437
      %v439 = vpop.f32.mrf.mxu0
      %v440 = vadd.f32 %v266, %v439
      %441 = vdwg.mxu0
      %442 = vst [vmem:[%s208] sm:$0xff] %v355
      %443 = vst [vmem:[%s208 + $0x8] sm:$0xff] %v357
      %444 = vst [vmem:[%s208 + $0x10] sm:$0xff] %v432
      %445 = vst [vmem:[%s208 + $0x18] sm:$0xff] %v434
      %446 = vst [vmem:[%s208 + $0x20] sm:$0x3] %v361
      %447 = vst [vmem:[%s208 + $0x28] sm:$0x3] %v363
      %448 = vst [vmem:[%s208 + $0x30] sm:$0x3] %v438
      %449 = vst [vmem:[%s208 + $0x38] sm:$0x3] %v440
      %s450 = smul.u32 4, %s19
      %p451 = scmp.lt.s32.totalorder %s18, 1
      %s452 = scalar_select %p451, %s18, 1
      %p453 = scmp.lt.s32.totalorder %s450, 3
      %s454 = scalar_select %p453, %s450, 3
      %s455 = smul.addr %s452, 8
      %s456 = sadd.s32 %s454, %s455
      %s457 = smul.addr %s456, 8
      %s458 = scalar_lea.vmem %s3, %s457
      // Predicated region
      $region33: #{tpu_custom_call.1} parent=31 // pred_check
        %p459 = pneg %p116
      $region34: #{tpu_custom_call.1} parent=31 // pred_check_branch
        %461 = sbr.rel (%p459) target = $region36
      $region35: #{tpu_custom_call.1} parent=31 // pred_region
        %s462 = smul.u32 4, %s19
      $region36: #{tpu_custom_call.1} parent=31 // pred_fallthru
        _
    $region32: #{tpu_custom_call.1} parent=5 // pred_fallthru
      _
    %p463 = scmp.le.s32.totalorder 2, %s9
    // Predicated region
    $region37: #{tpu_custom_call.1} parent=5 // pred_check
      %p464 = pneg %p463
    $region38: #{tpu_custom_call.1} parent=5 // pred_check_branch
      %466 = sbr.rel (%p464) target = $region40
    $region39: #{tpu_custom_call.1} parent=5 // pred_region
      %s467 = ssub.s32 %s9, 2
      // Predicated region
      $region41: #{tpu_custom_call.1} parent=39 // pred_check
        %p468 = pneg %p122
      $region42: #{tpu_custom_call.1} parent=39 // pred_check_branch
        %470 = sbr.rel (%p468) target = $region44
      $region43: #{tpu_custom_call.1} parent=39 // pred_region
        %s471 = smul.u32 4, %s21
        %p472 = scmp.lt.s32.totalorder %s20, 1
        %s473 = scalar_select %p472, %s20, 1
        %p474 = scmp.lt.s32.totalorder %s471, 3
        %s475 = scalar_select %p474, %s471, 3
        %s476 = smul.addr %s473, 8
        %s477 = sadd.s32 %s475, %s476
        %s478 = smul.addr %s477, 8
        %s479 = scalar_lea.vmem %s3, %s478
      $region44: #{tpu_custom_call.1} parent=39 // pred_fallthru
        _
    $region40: #{tpu_custom_call.1} parent=5 // pred_fallthru
      _
  $region6: #{tpu_custom_call.1} parent=0 // loop_footer
    %s13 = sadd.s32 1, %s9
  $region7: #{tpu_custom_call.1} parent=0 // loop_footer_branch
    %8 = sbr.rel target = $region3
  $region8: #{tpu_custom_call.1} parent=0 // loop_exit
    _

</llo_original>
